<compile_context>
chip_gen: v7x
topology: tpu7x:2x2x1
jax: 0.10.0
libtpu: 0.0.40
codegen_flags: <defaults>
</compile_context>

<pallas_src>
import jax
import jax.numpy as jnp
from jax.experimental import pallas as pl
from jax.experimental.pallas import tpu as pltpu

NUM_PACKED = 4      # sigmoid, tanh, relu, prelu (softmax handled in the wrapper)
LANE_CHUNK = 256    # rows handled per inner-loop step (keeps every intermediate small)


def perceptron_kernel(x_ref, w_ref, params_ref, out_ref):
    """x_ref:   (TB, F)  VMEM  input rows
       w_ref:   (F, 8)   VMEM  Linear weight column replicated to 8 lanes
       params:  (2,)     SMEM  [bias, prelu_alpha]
       out_ref: (4, TB)  VMEM  lane-major packed activations [sigmoid, tanh, relu, prelu]."""
    bias = params_ref[0]
    alpha = params_ref[1]
    w8 = w_ref[...]                                    # (F, 8) -- tiny, stays in vregs

    tb = x_ref.shape[0]
    chunk = tb if tb < LANE_CHUNK else LANE_CHUNK      # static (wrapper guarantees tb % chunk == 0)
    n_chunks = tb // chunk

    def do_chunk(row0):
        x_c = x_ref[pl.ds(row0, chunk), :]             # (chunk, F)
        # MXU dot product; 8 identical output columns so the result can be moved to lane-major
        # orientation with one canonical (chunk, 8) -> (8, chunk) transpose.
        r8 = jnp.dot(x_c, w8, preferred_element_type=jnp.float32,
                     precision=jax.lax.Precision.HIGHEST)          # (chunk, 8)
        r = r8.T[0:1, :] + bias                        # (1, chunk): batch now on the lane axis
        sig = 0.5 * (jnp.tanh(0.5 * r) + 1.0)          # sigmoid via tanh: exact, one EUP op
        tanh_r = jnp.tanh(r)
        relu_r = jnp.maximum(r, 0.0)
        prelu_r = jnp.where(r >= 0.0, r, alpha * r)
        # Single lane-dense store of all four activations for this chunk.
        out_ref[:, pl.ds(row0, chunk)] = jnp.concatenate(
            [sig, tanh_r, relu_r, prelu_r], axis=0)    # (4, chunk)

    if n_chunks == 1:
        do_chunk(0)
    else:
        def body(c, carry):
            do_chunk(pl.multiple_of(c * chunk, chunk))
            return carry
        jax.lax.fori_loop(0, n_chunks, body, 0)


def _choose_tile(batch, features):
    """Byte-budgeted, generation-aware batch tile and VMEM limit."""
    try:
        vmem_bytes = int(pltpu.get_tpu_info().vmem_capacity_bytes)
    except Exception:
        vmem_bytes = 64 * 1024 * 1024                  # conservative: v7x per-TensorCore VMEM
    vmem_limit = min(vmem_bytes * 3 // 4, 100 * 1024 * 1024)

    if batch <= LANE_CHUNK:
        return int(batch), int(vmem_limit)             # single resident block (toy / tiny batch)

    lanes_f = pl.cdiv(features, 128) * 128             # x blocks are lane-padded in VMEM
    bytes_per_row = (lanes_f * 4 * 2                   # x block, double-buffered
                     + 8 * 4 * 2)                      # (4, TB) out block, sublane-padded, 2 bufs
    tb = (vmem_limit * 3 // 5) // bytes_per_row        # leave headroom for internal scratch
    tb = min(tb, 32768, max(LANE_CHUNK, pl.cdiv(batch, 4)))   # >=4 steps: pipelining / megacore
    tb = max(LANE_CHUNK, (tb // LANE_CHUNK) * LANE_CHUNK)     # chunk- and lane-aligned
    return int(tb), int(vmem_limit)


def perceptron_forward(x, w, bias, alpha):
    """x: (B, F) f32; w: (F, 1) Linear weight (transposed); bias, alpha: scalars.
    Returns [sigmoid, tanh, relu, prelu, softmax] of the (B, 1) linear output, each of shape (B,)."""
    B, F = x.shape
    w_col = jnp.asarray(w, jnp.float32).reshape(F, 1)
    w8 = jnp.tile(w_col, (1, 8))                       # (F, 8): replicated weight column
    params = jnp.stack([jnp.asarray(bias, jnp.float32).reshape(()),
                        jnp.asarray(alpha, jnp.float32).reshape(())])  # (2,) -> SMEM

    TB, vmem_limit = _choose_tile(B, F)

    xk = x.astype(jnp.float32)
    Bp = B
    if TB == B and B % 8 != 0:                         # tiny-batch path: keep the block 8-row aligned
        Bp = ((B + 7) // 8) * 8
        xk = jnp.pad(xk, ((0, Bp - B), (0, 0)))
        TB = Bp

    grid = (pl.cdiv(Bp, TB),)

    packed = pl.pallas_call(
        perceptron_kernel,
        out_shape=jax.ShapeDtypeStruct((NUM_PACKED, Bp), jnp.float32),
        grid=grid,
        in_specs=[
            pl.BlockSpec((TB, F), lambda i: (i, 0)),                 # x rows for this grid step
            pl.BlockSpec((F, 8), lambda i: (0, 0)),                  # weight (resident)
            pl.BlockSpec(memory_space=pltpu.MemorySpace.SMEM),       # [bias, alpha] scalars
        ],
        out_specs=pl.BlockSpec((NUM_PACKED, TB), lambda i: (0, i)),  # lane-dense packed output
        compiler_params=pltpu.CompilerParams(
            dimension_semantics=("parallel",),
            vmem_limit_bytes=vmem_limit,
        ),
    )(xk, w8, params)

    if Bp != B:
        packed = packed[:, :B]

    # nn.Softmax() (implicit dim=1 on a 2-D input) over the size-1 feature dim == 1.0 everywhere.
    softmax_out = jnp.ones((B,), jnp.float32)
    return [packed[0], packed[1], packed[2], packed[3], softmax_out]


if __name__ == "__main__":
    B, F = 8, 32

    key = jax.random.PRNGKey(0)
    kx, kw, kb = jax.random.split(key, 3)

    x = jax.random.normal(kx, (B, F), dtype=jnp.float32)
    bound = 1.0 / float(F) ** 0.5                      # PyTorch Linear init range
    w = jax.random.uniform(kw, (F, 1), minval=-bound, maxval=bound, dtype=jnp.float32)
    b = jax.random.uniform(kb, (), minval=-bound, maxval=bound, dtype=jnp.float32)
    alpha = jnp.float32(0.25)                          # PReLU default init (num_parameters=1)

    outs = perceptron_forward(x, w, b, alpha)
    outs = [jax.block_until_ready(o) for o in outs]

    # Pure-JAX reference of the PyTorch forward.
    r = x @ w + b                                      # (B, 1)
    refs = [
        jax.nn.sigmoid(r).reshape(B),
        jnp.tanh(r).reshape(B),
        jnp.maximum(r, 0.0).reshape(B),
        jnp.where(r >= 0.0, r, alpha * r).reshape(B),
        jax.nn.softmax(r, axis=1).reshape(B),          # softmax over the size-1 dim -> ones
    ]
    names = ["sigmoid", "tanh", "relu", "prelu", "softmax"]
    for name, got, want in zip(names, outs, refs):
        assert got.shape == (B,), (name, got.shape)
        assert jnp.allclose(got, want, atol=1e-4, rtol=1e-4), (name, got, want)

    print("KERNEL_OK")
</pallas_src>

<mosaic_0001>
module attributes {stable_mosaic.version = 11 : i64} {
  func.func @perceptron_kernel(%arg0: i32, %arg1: memref<8x32xf32, #tpu.memory_space<vmem>>, %arg2: memref<32x8xf32, #tpu.memory_space<vmem>>, %arg3: memref<2xf32, #tpu.memory_space<smem>>, %arg4: memref<4x8xf32, #tpu.memory_space<vmem>>) attributes {dimension_semantics = [#tpu.dimension_semantics<parallel>], iteration_bounds = array<i64: 1>, scalar_prefetch = 0 : i64, scratch_operands = 0 : i64, tpu.core_type = #tpu.core_type<tc>, window_params = [{transform_indices = @transform_0, window_bounds = array<i64: 8, 32>}, {pipeline_mode = #tpu.pipeline_mode<synchronous>, transform_indices = @transform_1, window_bounds = array<i64: 32, 8>}, {transform_indices = @transform_2, window_bounds = array<i64: 2>}, {transform_indices = @transform_3, window_bounds = array<i64: 4, 8>}]} {
    %c0 = arith.constant 0 : index
    %0 = memref.load %arg3[%c0] : memref<2xf32, #tpu.memory_space<smem>>
    %c1 = arith.constant 1 : index
    %1 = memref.load %arg3[%c1] : memref<2xf32, #tpu.memory_space<smem>>
    %c0_0 = arith.constant 0 : index
    %c0_1 = arith.constant 0 : index
    %2 = vector.load %arg2[%c0_0, %c0_1] : memref<32x8xf32, #tpu.memory_space<vmem>>, vector<32x8xf32>
    %c0_2 = arith.constant 0 : index
    %c0_3 = arith.constant 0 : index
    %3 = vector.load %arg1[%c0_2, %c0_3] : memref<8x32xf32, #tpu.memory_space<vmem>>, vector<8x32xf32>
    %cst = arith.constant dense<0.000000e+00> : vector<8x8xf32>
    %4 = tpu.matmul %3, %2, %cst {dimension_numbers = #tpu.dot_dimension_numbers<[1], [0], [0], [1], [0, 0, 1, 1], [], []>, precision = #tpu.contract_precision<fp32>} : vector<8x32xf32>, vector<32x8xf32>, vector<8x8xf32> -> vector<8x8xf32>
    %5 = tpu.transpose %4, [1, 0] : vector<8x8xf32> -> vector<8x8xf32>
    %6 = vector.extract_strided_slice %5 {offsets = [0, 0], sizes = [1, 8], strides = [1, 1]} : vector<8x8xf32> to vector<1x8xf32>
    %7 = vector.broadcast %0 : f32 to vector<1x8xf32>
    %8 = arith.addf %6, %7 : vector<1x8xf32>
    %cst_4 = arith.constant 5.000000e-01 : f32
    %9 = vector.broadcast %cst_4 : f32 to vector<1x8xf32>
    %10 = arith.mulf %9, %8 : vector<1x8xf32>
    %11 = math.tanh %10 : vector<1x8xf32>
    %cst_5 = arith.constant 1.000000e+00 : f32
    %12 = vector.broadcast %cst_5 : f32 to vector<1x8xf32>
    %13 = arith.addf %11, %12 : vector<1x8xf32>
    %cst_6 = arith.constant 5.000000e-01 : f32
    %14 = vector.broadcast %cst_6 : f32 to vector<1x8xf32>
    %15 = arith.mulf %14, %13 : vector<1x8xf32>
    %16 = math.tanh %8 : vector<1x8xf32>
    %cst_7 = arith.constant 0.000000e+00 : f32
    %17 = vector.broadcast %cst_7 : f32 to vector<1x8xf32>
    %18 = arith.maximumf %8, %17 : vector<1x8xf32>
    %cst_8 = arith.constant 0.000000e+00 : f32
    %19 = vector.broadcast %cst_8 : f32 to vector<1x8xf32>
    %20 = arith.cmpf oge, %8, %19 : vector<1x8xf32>
    %21 = vector.broadcast %1 : f32 to vector<1x8xf32>
    %22 = arith.mulf %21, %8 : vector<1x8xf32>
    %23 = arith.select %20, %8, %22 : vector<1x8xi1>, vector<1x8xf32>
    %24 = tpu.concatenate %15, %16, %18, %23 in 0 : vector<1x8xf32>, vector<1x8xf32>, vector<1x8xf32>, vector<1x8xf32> -> vector<4x8xf32>
    %c0_9 = arith.constant 0 : index
    %c0_10 = arith.constant 0 : index
    %25 = vector.load %arg4[%c0_9, %c0_10] : memref<4x8xf32, #tpu.memory_space<vmem>>, vector<4x8xf32>
    tpu.vector_store %arg4[%c0_9, %c0_10], %24 {strides = array<i32>} : memref<4x8xf32, #tpu.memory_space<vmem>>, vector<4x8xf32>,
    return
  }
  func.func @transform_0(%arg0: i32) -> (i32, i32) {
    %c0_i32 = arith.constant 0 : i32
    %c0_i32_0 = arith.constant 0 : i32
    return %arg0, %c0_i32 : i32, i32
  }
  func.func @transform_1(%arg0: i32) -> (i32, i32) {
    %c0_i32 = arith.constant 0 : i32
    %c0_i32_0 = arith.constant 0 : i32
    %c0_i32_1 = arith.constant 0 : i32
    return %c0_i32, %c0_i32_0 : i32, i32
  }
  func.func @transform_2(%arg0: i32) -> i32 {
    %c0_i32 = arith.constant 0 : i32
    %c0_i32_0 = arith.constant 0 : i32
    return %c0_i32 : i32
  }
  func.func @transform_3(%arg0: i32) -> (i32, i32) {
    %c0_i32 = arith.constant 0 : i32
    %c0_i32_0 = arith.constant 0 : i32
    return %c0_i32, %arg0 : i32, i32
  }
}

</mosaic_0001>

<llo_original>
// kernel: tpu_custom_call.1
$region0: #{tpu_custom_call.1}
  #allocation0 [shape = 'u32[]', space=smem, size = 0x4, offset = 0x4, fixed_abs, tag = 'smem constant byte address 0x4 - core index']
  #allocation1 [shape = 'u32[144,128]{1,0:T(1,128)}', space=vmem, size = 0x12000, scoped, tag = 'internal scratch']
  %s0 = inlined_call_operand.vmem [shape: f32[8,32], index: 0, kind: input, shape index: {}]
  %s1 = inlined_call_operand.vmem [shape: f32[32,8], index: 1, kind: input, shape index: {}]
  %s2 = inlined_call_operand.vmem [shape: f32[2], index: 2, kind: input, shape index: {}]
  %s3 = inlined_call_operand.hbm [shape: f32[4,8], index: 3, kind: output, shape index: {}]
  %s4 = sld [smem:[#allocation0]]
  $region26: #{tpu_custom_call.1} parent=0
    _
  %s6 = ssub.s32 1, %s4
  %s7 = scalar_select 0, %s6, %s4
  $region1: #{tpu_custom_call.1} parent=0
    #allocation2 [shape = 'u8[512]{0}', space=smem, size = 0x200, scoped, tag = 'input window, operand 2, single buffered']
    #allocation3 [shape = 's32[1]{0}', space=sflag, size = 0x4, scoped, tag = 'scoped memory for tpu_custom_call.1']
    #allocation4 [shape = 's32[1]{0}', space=sflag, size = 0x4, scoped, tag = 'scoped memory for tpu_custom_call.1']
    #allocation5 [shape = 'u8[2048]{0}', space=vmem, size = 0x800, scoped, tag = 'output window, operand 0, single buffered']
    %8 = vsyncpa [#allocation4], 0
    %9 = vsyncpa [#allocation3], 0
    // Predicated region
    $region2: #{tpu_custom_call.1} parent=1 // pred_check
      _
    $region3: #{tpu_custom_call.1} parent=1 // pred_check_branch
      %11 = sbr.rel (0) target = $region5
    $region4: #{tpu_custom_call.1} parent=1 // pred_region
      _
    $region5: #{tpu_custom_call.1} parent=1 // pred_fallthru
      _
    // Predicated region
    $region6: #{tpu_custom_call.1} parent=1 // pred_check
      _
    $region7: #{tpu_custom_call.1} parent=1 // pred_check_branch
      %13 = sbr.rel (0) target = $region9
    $region8: #{tpu_custom_call.1} parent=1 // pred_region
      _
    $region9: #{tpu_custom_call.1} parent=1 // pred_fallthru
      _
    // Predicated region
    $region10: #{tpu_custom_call.1} parent=1 // pred_check
      _
    $region11: #{tpu_custom_call.1} parent=1 // pred_check_branch
      %15 = sbr.rel (0) target = $region13
    $region12: #{tpu_custom_call.1} parent=1 // pred_region
      %s17 = ssub.s32 16, 16
      %18 = vsyncadd [#allocation4], %s17
      %s20 = sshll.u32 %s2, 4
      %s21 = int_to_ptr.vmem [resolvable:$true] %s20
      %23 = dma.vmem_to_smem %s21, 16, [#allocation2], [#allocation4]
    $region13: #{tpu_custom_call.1} parent=1 // pred_fallthru
      _
    // Predicated region
    $region14: #{tpu_custom_call.1} parent=1 // pred_check
      _
    $region15: #{tpu_custom_call.1} parent=1 // pred_check_branch
      %25 = sbr.rel (0) target = $region17
    $region16: #{tpu_custom_call.1} parent=1 // pred_region
      %26 = dma.done [#allocation4], 16
    $region17: #{tpu_custom_call.1} parent=1 // pred_fallthru
      _
    %27 = sfence
    %s28 = sld [smem:[#allocation2]]
    %s29 = sld [smem:[#allocation2 + $0x1]]
    %v30 = vld [vmem:[%s1] sm:$0xff]
    %v31 = vld [vmem:[%s1 + $0x8] sm:$0xff]
    %v32 = vld [vmem:[%s1 + $0x10] sm:$0xff]
    %v33 = vld [vmem:[%s1 + $0x18] sm:$0xff]
    %v34 = vld [vmem:[%s0] sm:$0xff]
    %vm35 = vcmask 261120
    %v37 = vsel %vm35, %v34, 0
    %39 = vmatprep.subr.mxu0 0.0
    %v40 = vand.u32 %v30, 4294901760
    %41 = vmatpush1.msra.mxu0 %v40
    %42 = vmatprep.subr.mxu0 0.0
    %v43 = vand.u32 %v31, 4294901760
    %44 = vmatpush1.msra.mxu0 %v43
    %45 = vmatprep.subr.mxu0 0.0
    %v46 = vand.u32 %v32, 4294901760
    %47 = vmatpush1.msra.mxu0 %v46
    %48 = vmatprep.subr.mxu0 0.0
    %v49 = vand.u32 %v33, 4294901760
    %50 = vmatpush1.msra.mxu0 %v49
    %51 = vmatprep.subr.mxu0 0.0
    %52 = vmatpush1.msra.mxu0 0.0
    %53 = vmatprep.subr.mxu0 0.0
    %54 = vmatpush1.msra.mxu0 0.0
    %55 = vmatprep.subr.mxu0 0.0
    %56 = vmatpush1.msra.mxu0 0.0
    %57 = vmatprep.subr.mxu0 0.0
    %58 = vmatpush1.msra.mxu0 0.0
    %59 = vmatprep.subr.mxu0 0.0
    %60 = vmatpush1.msra.mxu0 0.0
    %61 = vmatprep.subr.mxu0 0.0
    %62 = vmatpush1.msra.mxu0 0.0
    %63 = vmatprep.subr.mxu0 0.0
    %64 = vmatpush1.msra.mxu0 0.0
    %65 = vmatprep.subr.mxu0 0.0
    %66 = vmatpush1.msra.mxu0 0.0
    %67 = vmatprep.subr.mxu0 0.0
    %68 = vmatpush1.msra.mxu0 0.0
    %69 = vmatprep.subr.mxu0 0.0
    %70 = vmatpush1.msra.mxu0 0.0
    %71 = vmatprep.subr.mxu0 0.0
    %72 = vmatpush1.msra.mxu0 0.0
    %73 = vmatprep.subr.mxu0 0.0
    %74 = vmatpush1.msra.mxu0 0.0
    %75 = vmatprep.subr.mxu0 0.0
    %76 = vmatpush1.msra.mxu0 0.0
    %77 = vmatprep.subr.mxu0 0.0
    %78 = vmatpush1.msra.mxu0 0.0
    %79 = vmatprep.subr.mxu0 0.0
    %80 = vmatpush1.msra.mxu0 0.0
    %81 = vmatprep.subr.mxu0 0.0
    %82 = vmatpush1.msra.mxu0 0.0
    %83 = vmatprep.subr.mxu0 0.0
    %84 = vmatpush1.msra.mxu0 0.0
    %85 = vmatprep.subr.mxu0 0.0
    %86 = vmatpush1.msra.mxu0 0.0
    %87 = vmatprep.subr.mxu0 0.0
    %88 = vmatpush1.msra.mxu0 0.0
    %89 = vmatprep.subr.mxu0 0.0
    %90 = vmatpush1.msra.mxu0 0.0
    %91 = vmatprep.subr.mxu0 0.0
    %92 = vmatpush1.msra.mxu0 0.0
    %93 = vmatprep.subr.mxu0 0.0
    %94 = vmatpush1.msra.mxu0 0.0
    %95 = vmatprep.subr.mxu0 0.0
    %96 = vmatpush1.msra.mxu0 0.0
    %97 = vmatprep.subr.mxu0 0.0
    %98 = vmatpush1.msra.mxu0 0.0
    %99 = vmatprep.subr.mxu0 0.0
    %100 = vmatpush1.msra.mxu0 0.0
    %101 = vmatprep.subr.mxu0 0.0
    %102 = vmatpush1.msra.mxu0 0.0
    %103 = vmatprep.subr.mxu0 0.0
    %104 = vmatpush1.msra.mxu0 0.0
    %105 = vmatprep.subr.mxu0 0.0
    %106 = vmatpush1.msra.mxu0 0.0
    %107 = vmatprep.mubr.f32.mxu0 0.0
    %v108 = vand.u32 %v37, 4294901760
    %v109 = vsub.f32 %v37, %v108
    %v110 = vand.u32 %v109, 4294901760
    %v111 = vsub.f32 %v109, %v110
    %v112 = vand.u32 %v111, 4294901760
    %113 = vmatmul.mubr.f32.gmra.mrb[0].mxu0 %v112
    %v114 = vpop.f32.mrb[0].mxu0
    %v115 = vadd.f32 0.0, %v114
    %v116 = vpop.f32.mrb[0].mxu0
    %117 = vdwg.mxu0
    %118 = vmatprep.subr.mxu0 0.0
    %v119 = vand.u32 %v30, 4294901760
    %v120 = vsub.f32 %v30, %v119
    %v121 = vand.u32 %v120, 4294901760
    %v122 = vsub.f32 %v120, %v121
    %v123 = vand.u32 %v122, 4294901760
    %124 = vmatpush1.msra.mxu0 %v123
    %125 = vmatprep.subr.mxu0 0.0
    %v126 = vand.u32 %v31, 4294901760
    %v127 = vsub.f32 %v31, %v126
    %v128 = vand.u32 %v127, 4294901760
    %v129 = vsub.f32 %v127, %v128
    %v130 = vand.u32 %v129, 4294901760
    %131 = vmatpush1.msra.mxu0 %v130
    %132 = vmatprep.subr.mxu0 0.0
    %v133 = vand.u32 %v32, 4294901760
    %v134 = vsub.f32 %v32, %v133
    %v135 = vand.u32 %v134, 4294901760
    %v136 = vsub.f32 %v134, %v135
    %v137 = vand.u32 %v136, 4294901760
    %138 = vmatpush1.msra.mxu0 %v137
    %139 = vmatprep.subr.mxu0 0.0
    %v140 = vand.u32 %v33, 4294901760
    %v141 = vsub.f32 %v33, %v140
    %v142 = vand.u32 %v141, 4294901760
    %v143 = vsub.f32 %v141, %v142
    %v144 = vand.u32 %v143, 4294901760
    %145 = vmatpush1.msra.mxu0 %v144
    %146 = vmatprep.subr.mxu0 0.0
    %147 = vmatpush1.msra.mxu0 0.0
    %148 = vmatprep.subr.mxu0 0.0
    %149 = vmatpush1.msra.mxu0 0.0
    %150 = vmatprep.subr.mxu0 0.0
    %151 = vmatpush1.msra.mxu0 0.0
    %152 = vmatprep.subr.mxu0 0.0
    %153 = vmatpush1.msra.mxu0 0.0
    %154 = vmatprep.subr.mxu0 0.0
    %155 = vmatpush1.msra.mxu0 0.0
    %156 = vmatprep.subr.mxu0 0.0
    %157 = vmatpush1.msra.mxu0 0.0
    %158 = vmatprep.subr.mxu0 0.0
    %159 = vmatpush1.msra.mxu0 0.0
    %160 = vmatprep.subr.mxu0 0.0
    %161 = vmatpush1.msra.mxu0 0.0
    %162 = vmatprep.subr.mxu0 0.0
    %163 = vmatpush1.msra.mxu0 0.0
    %164 = vmatprep.subr.mxu0 0.0
    %165 = vmatpush1.msra.mxu0 0.0
    %166 = vmatprep.subr.mxu0 0.0
    %167 = vmatpush1.msra.mxu0 0.0
    %168 = vmatprep.subr.mxu0 0.0
    %169 = vmatpush1.msra.mxu0 0.0
    %170 = vmatprep.subr.mxu0 0.0
    %171 = vmatpush1.msra.mxu0 0.0
    %172 = vmatprep.subr.mxu0 0.0
    %173 = vmatpush1.msra.mxu0 0.0
    %174 = vmatprep.subr.mxu0 0.0
    %175 = vmatpush1.msra.mxu0 0.0
    %176 = vmatprep.subr.mxu0 0.0
    %177 = vmatpush1.msra.mxu0 0.0
    %178 = vmatprep.subr.mxu0 0.0
    %179 = vmatpush1.msra.mxu0 0.0
    %180 = vmatprep.subr.mxu0 0.0
    %181 = vmatpush1.msra.mxu0 0.0
    %182 = vmatprep.subr.mxu0 0.0
    %183 = vmatpush1.msra.mxu0 0.0
    %184 = vmatprep.subr.mxu0 0.0
    %185 = vmatpush1.msra.mxu0 0.0
    %186 = vmatprep.subr.mxu0 0.0
    %187 = vmatpush1.msra.mxu0 0.0
    %188 = vmatprep.subr.mxu0 0.0
    %189 = vmatpush1.msra.mxu0 0.0
    %190 = vmatprep.subr.mxu0 0.0
    %191 = vmatpush1.msra.mxu0 0.0
    %192 = vmatprep.subr.mxu0 0.0
    %193 = vmatpush1.msra.mxu0 0.0
    %194 = vmatprep.subr.mxu0 0.0
    %195 = vmatpush1.msra.mxu0 0.0
    %196 = vmatprep.subr.mxu0 0.0
    %197 = vmatpush1.msra.mxu0 0.0
    %198 = vmatprep.subr.mxu0 0.0
    %199 = vmatpush1.msra.mxu0 0.0
    %200 = vmatprep.subr.mxu0 0.0
    %201 = vmatpush1.msra.mxu0 0.0
    %202 = vmatprep.mubr.f32.mxu0 0.0
    %v203 = vand.u32 %v37, 4294901760
    %204 = vmatmul.mubr.f32.gmra.mrb[0].mxu0 %v203
    %v205 = vpop.f32.mrb[0].mxu0
    %v206 = vadd.f32 %v115, %v205
    %v207 = vpop.f32.mrb[0].mxu0
    %208 = vdwg.mxu0
    %209 = vmatprep.subr.mxu0 0.0
    %v210 = vand.u32 %v30, 4294901760
    %v211 = vsub.f32 %v30, %v210
    %212 = vmatpush1.msra.mxu0 %v211
    %213 = vmatprep.subr.mxu0 0.0
    %v214 = vand.u32 %v31, 4294901760
    %v215 = vsub.f32 %v31, %v214
    %216 = vmatpush1.msra.mxu0 %v215
    %217 = vmatprep.subr.mxu0 0.0
    %v218 = vand.u32 %v32, 4294901760
    %v219 = vsub.f32 %v32, %v218
    %220 = vmatpush1.msra.mxu0 %v219
    %221 = vmatprep.subr.mxu0 0.0
    %v222 = vand.u32 %v33, 4294901760
    %v223 = vsub.f32 %v33, %v222
    %224 = vmatpush1.msra.mxu0 %v223
    %225 = vmatprep.subr.mxu0 0.0
    %226 = vmatpush1.msra.mxu0 0.0
    %227 = vmatprep.subr.mxu0 0.0
    %228 = vmatpush1.msra.mxu0 0.0
    %229 = vmatprep.subr.mxu0 0.0
    %230 = vmatpush1.msra.mxu0 0.0
    %231 = vmatprep.subr.mxu0 0.0
    %232 = vmatpush1.msra.mxu0 0.0
    %233 = vmatprep.subr.mxu0 0.0
    %234 = vmatpush1.msra.mxu0 0.0
    %235 = vmatprep.subr.mxu0 0.0
    %236 = vmatpush1.msra.mxu0 0.0
    %237 = vmatprep.subr.mxu0 0.0
    %238 = vmatpush1.msra.mxu0 0.0
    %239 = vmatprep.subr.mxu0 0.0
    %240 = vmatpush1.msra.mxu0 0.0
    %241 = vmatprep.subr.mxu0 0.0
    %242 = vmatpush1.msra.mxu0 0.0
    %243 = vmatprep.subr.mxu0 0.0
    %244 = vmatpush1.msra.mxu0 0.0
    %245 = vmatprep.subr.mxu0 0.0
    %246 = vmatpush1.msra.mxu0 0.0
    %247 = vmatprep.subr.mxu0 0.0
    %248 = vmatpush1.msra.mxu0 0.0
    %249 = vmatprep.subr.mxu0 0.0
    %250 = vmatpush1.msra.mxu0 0.0
    %251 = vmatprep.subr.mxu0 0.0
    %252 = vmatpush1.msra.mxu0 0.0
    %253 = vmatprep.subr.mxu0 0.0
    %254 = vmatpush1.msra.mxu0 0.0
    %255 = vmatprep.subr.mxu0 0.0
    %256 = vmatpush1.msra.mxu0 0.0
    %257 = vmatprep.subr.mxu0 0.0
    %258 = vmatpush1.msra.mxu0 0.0
    %259 = vmatprep.subr.mxu0 0.0
    %260 = vmatpush1.msra.mxu0 0.0
    %261 = vmatprep.subr.mxu0 0.0
    %262 = vmatpush1.msra.mxu0 0.0
    %263 = vmatprep.subr.mxu0 0.0
    %264 = vmatpush1.msra.mxu0 0.0
    %265 = vmatprep.subr.mxu0 0.0
    %266 = vmatpush1.msra.mxu0 0.0
    %267 = vmatprep.subr.mxu0 0.0
    %268 = vmatpush1.msra.mxu0 0.0
    %269 = vmatprep.subr.mxu0 0.0
    %270 = vmatpush1.msra.mxu0 0.0
    %271 = vmatprep.subr.mxu0 0.0
    %272 = vmatpush1.msra.mxu0 0.0
    %273 = vmatprep.subr.mxu0 0.0
    %274 = vmatpush1.msra.mxu0 0.0
    %275 = vmatprep.subr.mxu0 0.0
    %276 = vmatpush1.msra.mxu0 0.0
    %277 = vmatprep.subr.mxu0 0.0
    %278 = vmatpush1.msra.mxu0 0.0
    %279 = vmatprep.subr.mxu0 0.0
    %280 = vmatpush1.msra.mxu0 0.0
    %281 = vmatprep.mubr.f32.mxu0 0.0
    %v282 = vand.u32 %v37, 4294901760
    %v283 = vsub.f32 %v37, %v282
    %284 = vmatmul.mubr.f32.gmra.mrb[0].mxu0 %v283
    %v285 = vpop.f32.mrb[0].mxu0
    %v286 = vadd.f32 %v206, %v285
    %v287 = vpop.f32.mrb[0].mxu0
    %288 = vdwg.mxu0
    %289 = vmatprep.subr.mxu0 0.0
    %v290 = vand.u32 %v30, 4294901760
    %291 = vmatpush1.msra.mxu0 %v290
    %292 = vmatprep.subr.mxu0 0.0
    %v293 = vand.u32 %v31, 4294901760
    %294 = vmatpush1.msra.mxu0 %v293
    %295 = vmatprep.subr.mxu0 0.0
    %v296 = vand.u32 %v32, 4294901760
    %297 = vmatpush1.msra.mxu0 %v296
    %298 = vmatprep.subr.mxu0 0.0
    %v299 = vand.u32 %v33, 4294901760
    %300 = vmatpush1.msra.mxu0 %v299
    %301 = vmatprep.subr.mxu0 0.0
    %302 = vmatpush1.msra.mxu0 0.0
    %303 = vmatprep.subr.mxu0 0.0
    %304 = vmatpush1.msra.mxu0 0.0
    %305 = vmatprep.subr.mxu0 0.0
    %306 = vmatpush1.msra.mxu0 0.0
    %307 = vmatprep.subr.mxu0 0.0
    %308 = vmatpush1.msra.mxu0 0.0
    %309 = vmatprep.subr.mxu0 0.0
    %310 = vmatpush1.msra.mxu0 0.0
    %311 = vmatprep.subr.mxu0 0.0
    %312 = vmatpush1.msra.mxu0 0.0
    %313 = vmatprep.subr.mxu0 0.0
    %314 = vmatpush1.msra.mxu0 0.0
    %315 = vmatprep.subr.mxu0 0.0
    %316 = vmatpush1.msra.mxu0 0.0
    %317 = vmatprep.subr.mxu0 0.0
    %318 = vmatpush1.msra.mxu0 0.0
    %319 = vmatprep.subr.mxu0 0.0
    %320 = vmatpush1.msra.mxu0 0.0
    %321 = vmatprep.subr.mxu0 0.0
    %322 = vmatpush1.msra.mxu0 0.0
    %323 = vmatprep.subr.mxu0 0.0
    %324 = vmatpush1.msra.mxu0 0.0
    %325 = vmatprep.subr.mxu0 0.0
    %326 = vmatpush1.msra.mxu0 0.0
    %327 = vmatprep.subr.mxu0 0.0
    %328 = vmatpush1.msra.mxu0 0.0
    %329 = vmatprep.subr.mxu0 0.0
    %330 = vmatpush1.msra.mxu0 0.0
    %331 = vmatprep.subr.mxu0 0.0
    %332 = vmatpush1.msra.mxu0 0.0
    %333 = vmatprep.subr.mxu0 0.0
    %334 = vmatpush1.msra.mxu0 0.0
    %335 = vmatprep.subr.mxu0 0.0
    %336 = vmatpush1.msra.mxu0 0.0
    %337 = vmatprep.subr.mxu0 0.0
    %338 = vmatpush1.msra.mxu0 0.0
    %339 = vmatprep.subr.mxu0 0.0
    %340 = vmatpush1.msra.mxu0 0.0
    %341 = vmatprep.subr.mxu0 0.0
    %342 = vmatpush1.msra.mxu0 0.0
    %343 = vmatprep.subr.mxu0 0.0
    %344 = vmatpush1.msra.mxu0 0.0
    %345 = vmatprep.subr.mxu0 0.0
    %346 = vmatpush1.msra.mxu0 0.0
    %347 = vmatprep.subr.mxu0 0.0
    %348 = vmatpush1.msra.mxu0 0.0
    %349 = vmatprep.subr.mxu0 0.0
    %350 = vmatpush1.msra.mxu0 0.0
    %351 = vmatprep.subr.mxu0 0.0
    %352 = vmatpush1.msra.mxu0 0.0
    %353 = vmatprep.subr.mxu0 0.0
    %354 = vmatpush1.msra.mxu0 0.0
    %355 = vmatprep.subr.mxu0 0.0
    %356 = vmatpush1.msra.mxu0 0.0
    %357 = vmatprep.mubr.f32.mxu0 0.0
    %v358 = vand.u32 %v37, 4294901760
    %v359 = vsub.f32 %v37, %v358
    %v360 = vand.u32 %v359, 4294901760
    %361 = vmatmul.mubr.f32.gmra.mrb[0].mxu0 %v360
    %v362 = vpop.f32.mrb[0].mxu0
    %v363 = vadd.f32 %v286, %v362
    %v364 = vpop.f32.mrb[0].mxu0
    %365 = vdwg.mxu0
    %366 = vmatprep.subr.mxu0 0.0
    %v367 = vand.u32 %v30, 4294901760
    %v368 = vsub.f32 %v30, %v367
    %v369 = vand.u32 %v368, 4294901760
    %370 = vmatpush1.msra.mxu0 %v369
    %371 = vmatprep.subr.mxu0 0.0
    %v372 = vand.u32 %v31, 4294901760
    %v373 = vsub.f32 %v31, %v372
    %v374 = vand.u32 %v373, 4294901760
    %375 = vmatpush1.msra.mxu0 %v374
    %376 = vmatprep.subr.mxu0 0.0
    %v377 = vand.u32 %v32, 4294901760
    %v378 = vsub.f32 %v32, %v377
    %v379 = vand.u32 %v378, 4294901760
    %380 = vmatpush1.msra.mxu0 %v379
    %381 = vmatprep.subr.mxu0 0.0
    %v382 = vand.u32 %v33, 4294901760
    %v383 = vsub.f32 %v33, %v382
    %v384 = vand.u32 %v383, 4294901760
    %385 = vmatpush1.msra.mxu0 %v384
    %386 = vmatprep.subr.mxu0 0.0
    %387 = vmatpush1.msra.mxu0 0.0
    %388 = vmatprep.subr.mxu0 0.0
    %389 = vmatpush1.msra.mxu0 0.0
    %390 = vmatprep.subr.mxu0 0.0
    %391 = vmatpush1.msra.mxu0 0.0
    %392 = vmatprep.subr.mxu0 0.0
    %393 = vmatpush1.msra.mxu0 0.0
    %394 = vmatprep.subr.mxu0 0.0
    %395 = vmatpush1.msra.mxu0 0.0
    %396 = vmatprep.subr.mxu0 0.0
    %397 = vmatpush1.msra.mxu0 0.0
    %398 = vmatprep.subr.mxu0 0.0
    %399 = vmatpush1.msra.mxu0 0.0
    %400 = vmatprep.subr.mxu0 0.0
    %401 = vmatpush1.msra.mxu0 0.0
    %402 = vmatprep.subr.mxu0 0.0
    %403 = vmatpush1.msra.mxu0 0.0
    %404 = vmatprep.subr.mxu0 0.0
    %405 = vmatpush1.msra.mxu0 0.0
    %406 = vmatprep.subr.mxu0 0.0
    %407 = vmatpush1.msra.mxu0 0.0
    %408 = vmatprep.subr.mxu0 0.0
    %409 = vmatpush1.msra.mxu0 0.0
    %410 = vmatprep.subr.mxu0 0.0
    %411 = vmatpush1.msra.mxu0 0.0
    %412 = vmatprep.subr.mxu0 0.0
    %413 = vmatpush1.msra.mxu0 0.0
    %414 = vmatprep.subr.mxu0 0.0
    %415 = vmatpush1.msra.mxu0 0.0
    %416 = vmatprep.subr.mxu0 0.0
    %417 = vmatpush1.msra.mxu0 0.0
    %418 = vmatprep.subr.mxu0 0.0
    %419 = vmatpush1.msra.mxu0 0.0
    %420 = vmatprep.subr.mxu0 0.0
    %421 = vmatpush1.msra.mxu0 0.0
    %422 = vmatprep.subr.mxu0 0.0
    %423 = vmatpush1.msra.mxu0 0.0
    %424 = vmatprep.subr.mxu0 0.0
    %425 = vmatpush1.msra.mxu0 0.0
    %426 = vmatprep.subr.mxu0 0.0
    %427 = vmatpush1.msra.mxu0 0.0
    %428 = vmatprep.subr.mxu0 0.0
    %429 = vmatpush1.msra.mxu0 0.0
    %430 = vmatprep.subr.mxu0 0.0
    %431 = vmatpush1.msra.mxu0 0.0
    %432 = vmatprep.subr.mxu0 0.0
    %433 = vmatpush1.msra.mxu0 0.0
    %434 = vmatprep.subr.mxu0 0.0
    %435 = vmatpush1.msra.mxu0 0.0
    %436 = vmatprep.subr.mxu0 0.0
    %437 = vmatpush1.msra.mxu0 0.0
    %438 = vmatprep.subr.mxu0 0.0
    %439 = vmatpush1.msra.mxu0 0.0
    %440 = vmatprep.subr.mxu0 0.0
    %441 = vmatpush1.msra.mxu0 0.0
    %442 = vmatprep.mubr.f32.mxu0 0.0
    %v443 = vand.u32 %v37, 4294901760
    %444 = vmatmul.mubr.f32.gmra.mrb[0].mxu0 %v443
    %v445 = vpop.f32.mrb[0].mxu0
    %v446 = vadd.f32 %v363, %v445
    %v447 = vpop.f32.mrb[0].mxu0
    %448 = vdwg.mxu0
    %449 = vmatprep.subr.mxu0 0.0
    %v450 = vand.u32 %v30, 4294901760
    %451 = vmatpush1.msra.mxu0 %v450
    %452 = vmatprep.subr.mxu0 0.0
    %v453 = vand.u32 %v31, 4294901760
    %454 = vmatpush1.msra.mxu0 %v453
    %455 = vmatprep.subr.mxu0 0.0
    %v456 = vand.u32 %v32, 4294901760
    %457 = vmatpush1.msra.mxu0 %v456
    %458 = vmatprep.subr.mxu0 0.0
    %v459 = vand.u32 %v33, 4294901760
    %460 = vmatpush1.msra.mxu0 %v459
    %461 = vmatprep.subr.mxu0 0.0
    %462 = vmatpush1.msra.mxu0 0.0
    %463 = vmatprep.subr.mxu0 0.0
    %464 = vmatpush1.msra.mxu0 0.0
    %465 = vmatprep.subr.mxu0 0.0
    %466 = vmatpush1.msra.mxu0 0.0
    %467 = vmatprep.subr.mxu0 0.0
    %468 = vmatpush1.msra.mxu0 0.0
    %469 = vmatprep.subr.mxu0 0.0
    %470 = vmatpush1.msra.mxu0 0.0
    %471 = vmatprep.subr.mxu0 0.0
    %472 = vmatpush1.msra.mxu0 0.0
    %473 = vmatprep.subr.mxu0 0.0
    %474 = vmatpush1.msra.mxu0 0.0
    %475 = vmatprep.subr.mxu0 0.0
    %476 = vmatpush1.msra.mxu0 0.0
    %477 = vmatprep.subr.mxu0 0.0
    %478 = vmatpush1.msra.mxu0 0.0
    %479 = vmatprep.subr.mxu0 0.0
    %480 = vmatpush1.msra.mxu0 0.0
    %481 = vmatprep.subr.mxu0 0.0
    %482 = vmatpush1.msra.mxu0 0.0
    %483 = vmatprep.subr.mxu0 0.0
    %484 = vmatpush1.msra.mxu0 0.0
    %485 = vmatprep.subr.mxu0 0.0
    %486 = vmatpush1.msra.mxu0 0.0
    %487 = vmatprep.subr.mxu0 0.0
    %488 = vmatpush1.msra.mxu0 0.0
    %489 = vmatprep.subr.mxu0 0.0
    %490 = vmatpush1.msra.mxu0 0.0
    %491 = vmatprep.subr.mxu0 0.0
    %492 = vmatpush1.msra.mxu0 0.0
    %493 = vmatprep.subr.mxu0 0.0
    %494 = vmatpush1.msra.mxu0 0.0
    %495 = vmatprep.subr.mxu0 0.0
    %496 = vmatpush1.msra.mxu0 0.0
    %497 = vmatprep.subr.mxu0 0.0
    %498 = vmatpush1.msra.mxu0 0.0
    %499 = vmatprep.subr.mxu0 0.0
    %500 = vmatpush1.msra.mxu0 0.0
    %501 = vmatprep.subr.mxu0 0.0
    %502 = vmatpush1.msra.mxu0 0.0
    %503 = vmatprep.subr.mxu0 0.0
    %504 = vmatpush1.msra.mxu0 0.0
    %505 = vmatprep.subr.mxu0 0.0
    %506 = vmatpush1.msra.mxu0 0.0
    %507 = vmatprep.subr.mxu0 0.0
    %508 = vmatpush1.msra.mxu0 0.0
    %509 = vmatprep.subr.mxu0 0.0
    %510 = vmatpush1.msra.mxu0 0.0
    %511 = vmatprep.subr.mxu0 0.0
    %512 = vmatpush1.msra.mxu0 0.0
    %513 = vmatprep.subr.mxu0 0.0
    %514 = vmatpush1.msra.mxu0 0.0
    %515 = vmatprep.subr.mxu0 0.0
    %516 = vmatpush1.msra.mxu0 0.0
    %517 = vmatprep.mubr.f32.mxu0 0.0
    %v518 = vand.u32 %v37, 4294901760
    %519 = vmatmul.mubr.f32.gmra.mrb[0].mxu0 %v518
    %v520 = vpop.f32.mrb[0].mxu0
    %v521 = vadd.f32 %v446, %v520
    %v522 = vpop.f32.mrb[0].mxu0
    %523 = vdwg.mxu0
    %524 = vxpose.xlu0.b32.start [1/16] %v521, 128
    %525 = vxpose.xlu0.b32.cont [2/16] 0.0, 128
    %526 = vxpose.xlu0.b32.cont [3/16] 0.0, 128
    %527 = vxpose.xlu0.b32.cont [4/16] 0.0, 128
    %528 = vxpose.xlu0.b32.cont [5/16] 0.0, 128
    %529 = vxpose.xlu0.b32.cont [6/16] 0.0, 128
    %530 = vxpose.xlu0.b32.cont [7/16] 0.0, 128
    %531 = vxpose.xlu0.b32.cont [8/16] 0.0, 128
    %532 = vxpose.xlu0.b32.cont [9/16] 0.0, 128
    %533 = vxpose.xlu0.b32.cont [10/16] 0.0, 128
    %534 = vxpose.xlu0.b32.cont [11/16] 0.0, 128
    %535 = vxpose.xlu0.b32.cont [12/16] 0.0, 128
    %536 = vxpose.xlu0.b32.cont [13/16] 0.0, 128
    %537 = vxpose.xlu0.b32.cont [14/16] 0.0, 128
    %538 = vxpose.xlu0.b32.cont [15/16] 0.0, 128
    %539 = vxpose.xlu0.b32.end [16/16] 0.0, 128
    %v540 = vpop.trf.xlu0
    %v541 = vpop.trf.xlu0
    %v542 = vpop.trf.xlu0
    %v543 = vpop.trf.xlu0
    %v544 = vpop.trf.xlu0
    %v545 = vpop.trf.xlu0
    %v546 = vpop.trf.xlu0
    %v547 = vpop.trf.xlu0
    %v548 = vpop.trf.xlu0
    %v549 = vpop.trf.xlu0
    %v550 = vpop.trf.xlu0
    %v551 = vpop.trf.xlu0
    %v552 = vpop.trf.xlu0
    %v553 = vpop.trf.xlu0
    %v554 = vpop.trf.xlu0
    %v555 = vpop.trf.xlu0
    %v556 = vstv %s28
    %v557 = vadd.f32 %v540, %v556
    %v558 = vmul.f32 %v557, 0.5
    %v559 = vtanh.pop %v558
    %v560 = vadd.f32 %v559, 1.0
    %v561 = vmul.f32 %v560, 0.5
    %v562 = vtanh.pop %v557
    %v563 = vmax.f32 %v557, 0.0
    %vm564 = vcmp.ge.f32.partialorder %v557, 0.0
    %v565 = vstv %s29
    %v566 = vmul.f32 %v565, %v557
    %v567 = vsel %vm564, %v557, %v566
    %v569 = vrot.slane %v562, 7
    %v572 = vrot.slane %v563, 6
    %v575 = vrot.slane %v567, 5
    %vm577 = vcmask 1040384
    %v578 = vsel %vm577, %v561, %v569
    %vm579 = vcmask 1041408
    %v580 = vsel %vm579, %v578, %v572
    %vm581 = vcmask 1042432
    %v582 = vsel %vm581, %v580, %v575
    %vm583 = vcmask 60416
    %584 = vst.msk [vmem:[#allocation5] sm:$0xf] %vm583, %v582
    // Predicated region
    $region18: #{tpu_custom_call.1} parent=1 // pred_check
      _
    $region19: #{tpu_custom_call.1} parent=1 // pred_check_branch
      %586 = sbr.rel (0) target = $region21
    $region20: #{tpu_custom_call.1} parent=1 // pred_region
      %s588 = ssub.s32 64, 64
      %589 = vsyncadd [#allocation3], %s588
      %s591 = sshll.u32 [#allocation5], 4
      %s592 = int_to_ptr.vmem [resolvable:$true] %s591
      %594 = dma.vmem_to_hbm [thread:$0]  %s592, 64, %s3, [#allocation3]
    $region21: #{tpu_custom_call.1} parent=1 // pred_fallthru
      _
    // Predicated region
    $region22: #{tpu_custom_call.1} parent=1 // pred_check
      _
    $region23: #{tpu_custom_call.1} parent=1 // pred_check_branch
      %596 = sbr.rel (0) target = $region25
    $region24: #{tpu_custom_call.1} parent=1 // pred_region
      %597 = dma.done [#allocation3], 64
    $region25: #{tpu_custom_call.1} parent=1 // pred_fallthru
      _
    %598 = vsyncpa [#allocation3], 1
    %599 = vsyncpa [#allocation4], 1

</llo_original>
